<compile_context>
chip_gen: v7x
topology: tpu7x:2x2x1
jax: 0.10.0
libtpu: 0.0.40
codegen_flags: <defaults>
</compile_context>

<pallas_src>
import functools

import jax
import jax.numpy as jnp
from jax.experimental import pallas as pl
from jax.experimental.pallas import tpu as pltpu


def _round_up(x: int, m: int) -> int:
    return ((x + m - 1) // m) * m


def _next_pow2(x: int) -> int:
    return 1 << max(x - 1, 0).bit_length()


def moq_kernel(x_ref, w1_ref, b1_ref, w2_ref, b2_ref, wh_ref, bh_ref, out_ref):
    # feature_net: Linear -> ReLU -> Linear -> ReLU (MXU matmuls, f32 accumulate).
    # x is cast to the weight compute dtype here (no separate wrapper cast pass).
    x = x_ref[...].astype(w1_ref.dtype)
    h1 = jnp.dot(x, w1_ref[...], preferred_element_type=jnp.float32)
    h1 = jnp.maximum(h1 + b1_ref[...], 0.0)               # f32 elementwise (v5e-safe)
    h2 = jnp.dot(h1.astype(w2_ref.dtype), w2_ref[...],
                 preferred_element_type=jnp.float32)
    h2 = jnp.maximum(h2 + b2_ref[...], 0.0)
    # All objective heads fused into one lane-dense matmul: [TB, H_p] @ [H_p, OA_p].
    q = jnp.dot(h2.astype(wh_ref.dtype), wh_ref[...],
                preferred_element_type=jnp.float32)
    out_ref[...] = q + bh_ref[...]


def pack_params(params, compute_dtype=jnp.bfloat16):
    """One-time packing: flatten objective heads into one [H, O*A] matrix, zero-pad
    hidden / head lanes to multiples of 128, cast matmul operands to `compute_dtype`
    (bf16 default; pass jnp.float32 for a full-precision path).  Call once when the
    params are created/updated, NOT per forward step.  The state dim is deliberately
    left unpadded (review item: don't inflate x / w1 HBM traffic)."""
    w1, b1, w2, b2, wh, bh = (params["w1"], params["b1"], params["w2"],
                              params["b2"], params["wh"], params["bh"])
    S, H = w1.shape
    O, _, A = wh.shape
    H_p = _round_up(H, 128)
    OA_p = _round_up(O * A, 128)
    # TODO(synk): on v6e/v7x with true dims >=256, 256-aligned padding + TB=256 would
    # fill the 2x256^2 MXU better; kept 128-aligned here (also correct/optimal on v5e).

    wh_flat = jnp.transpose(wh, (1, 0, 2)).reshape(H, O * A)   # [H, O*A]
    bh_flat = bh.reshape(1, O * A)

    packed = {
        "w1": jnp.pad(w1, ((0, 0), (0, H_p - H))).astype(compute_dtype),
        "b1": jnp.pad(b1.reshape(1, H), ((0, 0), (0, H_p - H))).astype(jnp.float32),
        "w2": jnp.pad(w2, ((0, H_p - H), (0, H_p - H))).astype(compute_dtype),
        "b2": jnp.pad(b2.reshape(1, H), ((0, 0), (0, H_p - H))).astype(jnp.float32),
        "wh": jnp.pad(wh_flat, ((0, H_p - H), (0, OA_p - O * A))).astype(compute_dtype),
        "bh": jnp.pad(bh_flat, ((0, 0), (0, OA_p - O * A))).astype(jnp.float32),
    }
    meta = dict(state_dim=S, hidden=H, num_objectives=O, action_dim=A,
                H_p=H_p, OA_p=OA_p, compute_dtype=compute_dtype)
    return packed, meta


def _const_spec(shape):
    """Weight/bias BlockSpec: constant index_map, single-buffered (no point double
    buffering a block that never changes)."""
    index_map = lambda i, _s=shape: (0,) * len(_s)
    try:
        return pl.BlockSpec(shape, index_map, pipeline_mode=pl.Buffered(1))
    except TypeError:  # older jax without pipeline_mode on BlockSpec
        return pl.BlockSpec(shape, index_map)


def _choose_batch_tiling(B: int):
    """Bucket the padded batch (limits retraces across varying RL batch sizes) and
    pick a batch tile TB (multiple of 16 for bf16 sublane packing; >=2 grid steps
    for mid/large batches so the 'parallel' axis can shard across v7x's 2 TCs)."""
    if B <= 16:
        B_p = 16
    elif B <= 512:
        B_p = _next_pow2(B)
    else:
        B_p = _round_up(B, 256)

    if B_p >= 512:
        TB = 256
    elif B_p >= 256:
        TB = 128
    elif B_p >= 64:
        TB = B_p // 2          # 2 grid steps
    else:
        TB = B_p               # tiny acting batch: one 16-sublane tile
    return B_p, TB


def _vmem_limit_bytes(TB, S, H_p, OA_p, w_itemsize):
    """Explicit VMEM plan: double-buffered x/out tiles + single-buffered weights +
    f32 intermediates (h1, h2, q), then 1.5x fudge, capped with generation-aware
    headroom."""
    weights_b = (S * H_p + H_p * H_p + H_p * OA_p) * w_itemsize + (2 * H_p + OA_p) * 4
    io_b = 2 * (TB * S * 4) + 2 * (TB * OA_p * 4)
    interm_b = TB * (2 * H_p + OA_p) * 4
    need = weights_b + io_b + interm_b
    try:
        cap = pltpu.get_tpu_info().vmem_capacity_bytes - (12 << 20)  # leave headroom
    except Exception:
        cap = 48 << 20  # safe on every generation (incl. v7x's 64 MiB VMEM)
    cap = max(min(cap, 112 << 20), 32 << 20)
    return int(min(max(int(1.5 * need) + (4 << 20), 16 << 20), cap)), weights_b


def make_forward(meta):
    """Builds a forward: x [B, state_dim] f32 -> q [B, O, A] f32."""
    S, H = meta["state_dim"], meta["hidden"]
    O, A = meta["num_objectives"], meta["action_dim"]
    H_p, OA_p = meta["H_p"], meta["OA_p"]
    w_itemsize = jnp.dtype(meta["compute_dtype"]).itemsize

    @functools.partial(jax.jit, static_argnames=("B_p", "TB"))
    def _impl(x, w1, b1, w2, b2, wh, bh, B_p, TB):
        B = x.shape[0]
        # Batch padding only (no lane padding, no pre-cast); a no-op when B == B_p.
        x_p = x if B == B_p else jnp.pad(x, ((0, B_p - B), (0, 0)))
        grid = (B_p // TB,)

        vmem_limit, weights_b = _vmem_limit_bytes(TB, S, H_p, OA_p, w_itemsize)
        flops = 2 * B_p * (S * H_p + H_p * H_p + H_p * OA_p)
        bytes_accessed = B_p * S * 4 + weights_b + B_p * OA_p * 4

        out_flat = pl.pallas_call(
            moq_kernel,
            out_shape=jax.ShapeDtypeStruct((B_p, OA_p), jnp.float32),
            grid=grid,
            in_specs=[
                pl.BlockSpec((TB, S), lambda i: (i, 0)),   # x: batch-tiled, lane = S
                _const_spec((S, H_p)),                     # w1 (VMEM-resident, 1-buf)
                _const_spec((1, H_p)),                     # b1
                _const_spec((H_p, H_p)),                   # w2
                _const_spec((1, H_p)),                     # b2
                _const_spec((H_p, OA_p)),                  # packed objective heads
                _const_spec((1, OA_p)),                    # packed head biases
            ],
            out_specs=pl.BlockSpec((TB, OA_p), lambda i: (i, 0)),
            compiler_params=pltpu.CompilerParams(
                dimension_semantics=("parallel",),
                vmem_limit_bytes=vmem_limit,
            ),
            cost_estimate=pl.CostEstimate(
                flops=flops, transcendentals=0, bytes_accessed=bytes_accessed),
        )(x_p, w1, b1, w2, b2, wh, bh)
        return out_flat

    def forward(x, packed):
        B = x.shape[0]
        B_p, TB = _choose_batch_tiling(B)
        out_flat = _impl(x, packed["w1"], packed["b1"], packed["w2"], packed["b2"],
                         packed["wh"], packed["bh"], B_p=B_p, TB=TB)
        # Padded batch rows / padded head lanes are garbage by construction; slice off.
        return out_flat[:B, : O * A].reshape(B, O, A)

    return forward


def init_params(key, state_dim, action_dim, num_objectives, hidden_dim):
    """Deterministic synthetic init (shapes match the PyTorch module)."""
    ks = jax.random.split(key, 6)
    scale = 0.1
    return {
        "w1": scale * jax.random.normal(ks[0], (state_dim, hidden_dim), jnp.float32),
        "b1": scale * jax.random.normal(ks[1], (hidden_dim,), jnp.float32),
        "w2": scale * jax.random.normal(ks[2], (hidden_dim, hidden_dim), jnp.float32),
        "b2": scale * jax.random.normal(ks[3], (hidden_dim,), jnp.float32),
        "wh": scale * jax.random.normal(
            ks[4], (num_objectives, hidden_dim, action_dim), jnp.float32),
        "bh": scale * jax.random.normal(
            ks[5], (num_objectives, action_dim), jnp.float32),
    }


def reference_forward(x, params):
    """Pure-JAX f32 reference mirroring the PyTorch semantics."""
    h = jnp.maximum(x @ params["w1"] + params["b1"], 0.0)
    h = jnp.maximum(h @ params["w2"] + params["b2"], 0.0)
    q = jnp.einsum("bh,oha->boa", h, params["wh"]) + params["bh"][None, :, :]
    return q


if __name__ == "__main__":
    batch = 2
    state_dim = 8
    action_dim = 4
    num_objectives = 3
    hidden_dim = 32

    key = jax.random.PRNGKey(0)
    k_x, k_p = jax.random.split(key)
    x = jax.random.normal(k_x, (batch, state_dim), jnp.float32)
    params = init_params(k_p, state_dim, action_dim, num_objectives, hidden_dim)

    packed, meta = pack_params(params)          # one-time packing (hoisted)
    forward = make_forward(meta)

    q = forward(x, packed)
    q = jax.block_until_ready(q)

    q_ref = reference_forward(x, params)
    assert q.shape == (batch, num_objectives, action_dim), q.shape
    # bf16 matmul operands (f32 accumulate) vs pure-f32 reference -> relaxed tol.
    # (pack_params(params, jnp.float32) gives a full-f32 path if tighter Q targets
    # are required, e.g. on v5e where bf16 gains are smaller.)
    assert jnp.allclose(q, q_ref, atol=2e-2, rtol=2e-2), "mismatch vs reference"

    print("KERNEL_OK")
</pallas_src>

<mosaic_0001>
module attributes {stable_mosaic.version = 11 : i64} {
  func.func @moq_kernel(%arg0: i32, %arg1: memref<16x8xf32, #tpu.memory_space<vmem>>, %arg2: memref<8x128xbf16, #tpu.memory_space<vmem>>, %arg3: memref<1x128xf32, #tpu.memory_space<vmem>>, %arg4: memref<128x128xbf16, #tpu.memory_space<vmem>>, %arg5: memref<1x128xf32, #tpu.memory_space<vmem>>, %arg6: memref<128x128xbf16, #tpu.memory_space<vmem>>, %arg7: memref<1x128xf32, #tpu.memory_space<vmem>>, %arg8: memref<16x128xf32, #tpu.memory_space<vmem>>) attributes {dimension_semantics = [#tpu.dimension_semantics<parallel>], iteration_bounds = array<i64: 1>, scalar_prefetch = 0 : i64, scratch_operands = 0 : i64, tpu.core_type = #tpu.core_type<tc>, window_params = [{transform_indices = @transform_0, window_bounds = array<i64: 16, 8>}, {pipeline_mode = #tpu.pipeline_mode<synchronous>, transform_indices = @transform_1, window_bounds = array<i64: 8, 128>}, {pipeline_mode = #tpu.pipeline_mode<synchronous>, transform_indices = @transform_2, window_bounds = array<i64: 1, 128>}, {pipeline_mode = #tpu.pipeline_mode<synchronous>, transform_indices = @transform_3, window_bounds = array<i64: 128, 128>}, {pipeline_mode = #tpu.pipeline_mode<synchronous>, transform_indices = @transform_4, window_bounds = array<i64: 1, 128>}, {pipeline_mode = #tpu.pipeline_mode<synchronous>, transform_indices = @transform_5, window_bounds = array<i64: 128, 128>}, {pipeline_mode = #tpu.pipeline_mode<synchronous>, transform_indices = @transform_6, window_bounds = array<i64: 1, 128>}, {transform_indices = @transform_7, window_bounds = array<i64: 16, 128>}]} {
    %c0 = arith.constant 0 : index
    %c0_0 = arith.constant 0 : index
    %0 = vector.load %arg1[%c0, %c0_0] : memref<16x8xf32, #tpu.memory_space<vmem>>, vector<16x8xf32>
    %1 = arith.truncf %0 : vector<16x8xf32> to vector<16x8xbf16>
    %c0_1 = arith.constant 0 : index
    %c0_2 = arith.constant 0 : index
    %2 = vector.load %arg2[%c0_1, %c0_2] : memref<8x128xbf16, #tpu.memory_space<vmem>>, vector<8x128xbf16>
    %cst = arith.constant dense<0.000000e+00> : vector<16x128xf32>
    %3 = tpu.matmul %1, %2, %cst {dimension_numbers = #tpu.dot_dimension_numbers<[1], [0], [0], [1], [0, 0, 1, 1], [], []>} : vector<16x8xbf16>, vector<8x128xbf16>, vector<16x128xf32> -> vector<16x128xf32>
    %c0_3 = arith.constant 0 : index
    %c0_4 = arith.constant 0 : index
    %4 = vector.load %arg3[%c0_3, %c0_4] : memref<1x128xf32, #tpu.memory_space<vmem>>, vector<1x128xf32>
    %5 = vector.broadcast %4 : vector<1x128xf32> to vector<16x128xf32>
    %6 = arith.addf %3, %5 : vector<16x128xf32>
    %cst_5 = arith.constant 0.000000e+00 : f32
    %7 = vector.broadcast %cst_5 : f32 to vector<16x128xf32>
    %8 = arith.maximumf %6, %7 : vector<16x128xf32>
    %9 = arith.truncf %8 : vector<16x128xf32> to vector<16x128xbf16>
    %c0_6 = arith.constant 0 : index
    %c0_7 = arith.constant 0 : index
    %10 = vector.load %arg4[%c0_6, %c0_7] : memref<128x128xbf16, #tpu.memory_space<vmem>>, vector<128x128xbf16>
    %cst_8 = arith.constant dense<0.000000e+00> : vector<16x128xf32>
    %11 = tpu.matmul %9, %10, %cst_8 {dimension_numbers = #tpu.dot_dimension_numbers<[1], [0], [0], [1], [0, 0, 1, 1], [], []>} : vector<16x128xbf16>, vector<128x128xbf16>, vector<16x128xf32> -> vector<16x128xf32>
    %c0_9 = arith.constant 0 : index
    %c0_10 = arith.constant 0 : index
    %12 = vector.load %arg5[%c0_9, %c0_10] : memref<1x128xf32, #tpu.memory_space<vmem>>, vector<1x128xf32>
    %13 = vector.broadcast %12 : vector<1x128xf32> to vector<16x128xf32>
    %14 = arith.addf %11, %13 : vector<16x128xf32>
    %cst_11 = arith.constant 0.000000e+00 : f32
    %15 = vector.broadcast %cst_11 : f32 to vector<16x128xf32>
    %16 = arith.maximumf %14, %15 : vector<16x128xf32>
    %17 = arith.truncf %16 : vector<16x128xf32> to vector<16x128xbf16>
    %c0_12 = arith.constant 0 : index
    %c0_13 = arith.constant 0 : index
    %18 = vector.load %arg6[%c0_12, %c0_13] : memref<128x128xbf16, #tpu.memory_space<vmem>>, vector<128x128xbf16>
    %cst_14 = arith.constant dense<0.000000e+00> : vector<16x128xf32>
    %19 = tpu.matmul %17, %18, %cst_14 {dimension_numbers = #tpu.dot_dimension_numbers<[1], [0], [0], [1], [0, 0, 1, 1], [], []>} : vector<16x128xbf16>, vector<128x128xbf16>, vector<16x128xf32> -> vector<16x128xf32>
    %c0_15 = arith.constant 0 : index
    %c0_16 = arith.constant 0 : index
    %20 = vector.load %arg7[%c0_15, %c0_16] : memref<1x128xf32, #tpu.memory_space<vmem>>, vector<1x128xf32>
    %21 = vector.broadcast %20 : vector<1x128xf32> to vector<16x128xf32>
    %22 = arith.addf %19, %21 : vector<16x128xf32>
    %c0_17 = arith.constant 0 : index
    %c0_18 = arith.constant 0 : index
    %23 = vector.load %arg8[%c0_17, %c0_18] : memref<16x128xf32, #tpu.memory_space<vmem>>, vector<16x128xf32>
    tpu.vector_store %arg8[%c0_17, %c0_18], %22 {strides = array<i32>} : memref<16x128xf32, #tpu.memory_space<vmem>>, vector<16x128xf32>,
    return
  }
  func.func @transform_0(%arg0: i32) -> (i32, i32) {
    %c0_i32 = arith.constant 0 : i32
    %c0_i32_0 = arith.constant 0 : i32
    return %arg0, %c0_i32 : i32, i32
  }
  func.func @transform_1(%arg0: i32) -> (i32, i32) {
    %c0_i32 = arith.constant 0 : i32
    %c0_i32_0 = arith.constant 0 : i32
    %c0_i32_1 = arith.constant 0 : i32
    return %c0_i32, %c0_i32_0 : i32, i32
  }
  func.func @transform_2(%arg0: i32) -> (i32, i32) {
    %c0_i32 = arith.constant 0 : i32
    %c0_i32_0 = arith.constant 0 : i32
    %c0_i32_1 = arith.constant 0 : i32
    return %c0_i32, %c0_i32_0 : i32, i32
  }
  func.func @transform_3(%arg0: i32) -> (i32, i32) {
    %c0_i32 = arith.constant 0 : i32
    %c0_i32_0 = arith.constant 0 : i32
    %c0_i32_1 = arith.constant 0 : i32
    return %c0_i32, %c0_i32_0 : i32, i32
  }
  func.func @transform_4(%arg0: i32) -> (i32, i32) {
    %c0_i32 = arith.constant 0 : i32
    %c0_i32_0 = arith.constant 0 : i32
    %c0_i32_1 = arith.constant 0 : i32
    return %c0_i32, %c0_i32_0 : i32, i32
  }
  func.func @transform_5(%arg0: i32) -> (i32, i32) {
    %c0_i32 = arith.constant 0 : i32
    %c0_i32_0 = arith.constant 0 : i32
    %c0_i32_1 = arith.constant 0 : i32
    return %c0_i32, %c0_i32_0 : i32, i32
  }
  func.func @transform_6(%arg0: i32) -> (i32, i32) {
    %c0_i32 = arith.constant 0 : i32
    %c0_i32_0 = arith.constant 0 : i32
    %c0_i32_1 = arith.constant 0 : i32
    return %c0_i32, %c0_i32_0 : i32, i32
  }
  func.func @transform_7(%arg0: i32) -> (i32, i32) {
    %c0_i32 = arith.constant 0 : i32
    %c0_i32_0 = arith.constant 0 : i32
    return %arg0, %c0_i32 : i32, i32
  }
}

</mosaic_0001>

<llo_original>
// kernel: _impl.1
$region0: #{_impl.1}
  #allocation0 [shape = 'u32[]', space=smem, size = 0x4, offset = 0x4, fixed_abs, tag = 'smem constant byte address 0x4 - core index']
  #allocation1 [shape = 'u32[144,128]{1,0:T(1,128)}', space=vmem, size = 0x12000, scoped, tag = 'internal scratch']
  %s0 = inlined_call_operand.vmem [shape: f32[16,8], index: 0, kind: input, shape index: {}]
  %s1 = inlined_call_operand.vmem [shape: bf16[8,128], index: 1, kind: input, shape index: {}]
  %s2 = inlined_call_operand.vmem [shape: f32[1,128], index: 2, kind: input, shape index: {}]
  %s3 = inlined_call_operand.hbm [shape: bf16[128,128], index: 3, kind: input, shape index: {}]
  %s4 = inlined_call_operand.vmem [shape: f32[1,128], index: 4, kind: input, shape index: {}]
  %s5 = inlined_call_operand.hbm [shape: bf16[128,128], index: 5, kind: input, shape index: {}]
  %s6 = inlined_call_operand.vmem [shape: f32[1,128], index: 6, kind: input, shape index: {}]
  %s7 = inlined_call_operand.hbm [shape: f32[16,128], index: 7, kind: output, shape index: {}]
  %s8 = sld [smem:[#allocation0]]
  $region46: #{_impl.1} parent=0
    _
  %s10 = ssub.s32 1, %s8
  %s11 = scalar_select 0, %s10, %s8
  $region1: #{_impl.1} parent=0
    #allocation2 [shape = 'u8[32768]{0}', space=vmem, size = 0x8000, scoped, tag = 'input window, operand 3, single buffered']
    #allocation3 [shape = 's32[1]{0}', space=sflag, size = 0x4, scoped, tag = 'scoped memory for _impl.1']
    #allocation4 [shape = 's32[1]{0}', space=sflag, size = 0x4, scoped, tag = 'scoped memory for _impl.1']
    #allocation5 [shape = 'u8[32768]{0}', space=vmem, size = 0x8000, scoped, tag = 'input window, operand 5, single buffered']
    #allocation6 [shape = 's32[1]{0}', space=sflag, size = 0x4, scoped, tag = 'scoped memory for _impl.1']
    #allocation7 [shape = 'u8[8192]{0}', space=vmem, size = 0x2000, scoped, tag = 'output window, operand 0, single buffered']
    %12 = vsyncpa [#allocation3], 0
    %13 = vsyncpa [#allocation6], 0
    %14 = vsyncpa [#allocation4], 0
    // Predicated region
    $region2: #{_impl.1} parent=1 // pred_check
      _
    $region3: #{_impl.1} parent=1 // pred_check_branch
      %16 = sbr.rel (0) target = $region5
    $region4: #{_impl.1} parent=1 // pred_region
      _
    $region5: #{_impl.1} parent=1 // pred_fallthru
      _
    // Predicated region
    $region6: #{_impl.1} parent=1 // pred_check
      _
    $region7: #{_impl.1} parent=1 // pred_check_branch
      %18 = sbr.rel (0) target = $region9
    $region8: #{_impl.1} parent=1 // pred_region
      _
    $region9: #{_impl.1} parent=1 // pred_fallthru
      _
    // Predicated region
    $region10: #{_impl.1} parent=1 // pred_check
      _
    $region11: #{_impl.1} parent=1 // pred_check_branch
      %20 = sbr.rel (0) target = $region13
    $region12: #{_impl.1} parent=1 // pred_region
      _
    $region13: #{_impl.1} parent=1 // pred_fallthru
      _
    // Predicated region
    $region14: #{_impl.1} parent=1 // pred_check
      _
    $region15: #{_impl.1} parent=1 // pred_check_branch
      %22 = sbr.rel (0) target = $region17
    $region16: #{_impl.1} parent=1 // pred_region
      %s24 = ssub.s32 1024, 1024
      %25 = vsyncadd [#allocation3], %s24
      %s26 = sshll.u32 [#allocation2], 4
      %s27 = int_to_ptr.vmem [resolvable:$true] %s26
      %32 = dma.hbm_to_vmem [thread:$0]  %s3, 1024, %s27, [#allocation3], 64, 64, 4
    $region17: #{_impl.1} parent=1 // pred_fallthru
      _
    // Predicated region
    $region18: #{_impl.1} parent=1 // pred_check
      _
    $region19: #{_impl.1} parent=1 // pred_check_branch
      %34 = sbr.rel (0) target = $region21
    $region20: #{_impl.1} parent=1 // pred_region
      _
    $region21: #{_impl.1} parent=1 // pred_fallthru
      _
    // Predicated region
    $region22: #{_impl.1} parent=1 // pred_check
      _
    $region23: #{_impl.1} parent=1 // pred_check_branch
      %36 = sbr.rel (0) target = $region25
    $region24: #{_impl.1} parent=1 // pred_region
      %s38 = ssub.s32 1024, 1024
      %39 = vsyncadd [#allocation6], %s38
      %s40 = sshll.u32 [#allocation5], 4
      %s41 = int_to_ptr.vmem [resolvable:$true] %s40
      %46 = dma.hbm_to_vmem [thread:$0]  %s5, 1024, %s41, [#allocation6], 64, 64, 4
    $region25: #{_impl.1} parent=1 // pred_fallthru
      _
    // Predicated region
    $region26: #{_impl.1} parent=1 // pred_check
      _
    $region27: #{_impl.1} parent=1 // pred_check_branch
      %48 = sbr.rel (0) target = $region29
    $region28: #{_impl.1} parent=1 // pred_region
      _
    $region29: #{_impl.1} parent=1 // pred_fallthru
      _
    // Predicated region
    $region30: #{_impl.1} parent=1 // pred_check
      _
    $region31: #{_impl.1} parent=1 // pred_check_branch
      %50 = sbr.rel (0) target = $region33
    $region32: #{_impl.1} parent=1 // pred_region
      %51 = dma.done [#allocation3], 1024
    $region33: #{_impl.1} parent=1 // pred_fallthru
      _
    // Predicated region
    $region34: #{_impl.1} parent=1 // pred_check
      _
    $region35: #{_impl.1} parent=1 // pred_check_branch
      %53 = sbr.rel (0) target = $region37
    $region36: #{_impl.1} parent=1 // pred_region
      %54 = dma.done [#allocation6], 1024
    $region37: #{_impl.1} parent=1 // pred_fallthru
      _
    %v56 = vld [vmem:[%s0] sm:$0xff]
    %v57 = vld [vmem:[%s0 + $0x8] sm:$0xff]
    %v58 = vpack.c.bf16 %v57, %v56
    %v59 = vld [vmem:[%s1] sm:$0xf]
    %v60 = vld [vmem:[%s2] sm:$0x1]
    %v62 = vlaneseq
    %v63 = vshrl.u32 %v62, 7
    %v64 = vsub.s32 0, %v63
    %v65 = vrot.slane %v60, %v64
    %vm67 = vcmask 64512
    %v69 = vsel %vm67, %v58, 0
    %vm71 = vcmask 1043456
    %v73 = vsel %vm71, %v59, 0
    %75 = vmatprep.subr.bf16.mxu0 0
    %76 = vmatpush1.bf16.msra.mxu0 %v73
    %77 = vmatprep.subr.bf16.mxu0 0
    %78 = vmatpush1.bf16.msra.mxu0 0
    %79 = vmatprep.subr.bf16.mxu0 0
    %80 = vmatpush1.bf16.msra.mxu0 0
    %81 = vmatprep.subr.bf16.mxu0 0
    %82 = vmatpush1.bf16.msra.mxu0 0
    %83 = vmatprep.subr.bf16.mxu0 0
    %84 = vmatpush1.bf16.msra.mxu0 0
    %85 = vmatprep.subr.bf16.mxu0 0
    %86 = vmatpush1.bf16.msra.mxu0 0
    %87 = vmatprep.subr.bf16.mxu0 0
    %88 = vmatpush1.bf16.msra.mxu0 0
    %89 = vmatprep.subr.bf16.mxu0 0
    %90 = vmatpush1.bf16.msra.mxu0 0
    %91 = vmatprep.subr.bf16.mxu0 0
    %92 = vmatpush1.bf16.msra.mxu0 0
    %93 = vmatprep.subr.bf16.mxu0 0
    %94 = vmatpush1.bf16.msra.mxu0 0
    %95 = vmatprep.subr.bf16.mxu0 0
    %96 = vmatpush1.bf16.msra.mxu0 0
    %97 = vmatprep.subr.bf16.mxu0 0
    %98 = vmatpush1.bf16.msra.mxu0 0
    %99 = vmatprep.subr.bf16.mxu0 0
    %100 = vmatpush1.bf16.msra.mxu0 0
    %101 = vmatprep.subr.bf16.mxu0 0
    %102 = vmatpush1.bf16.msra.mxu0 0
    %103 = vmatprep.subr.bf16.mxu0 0
    %104 = vmatpush1.bf16.msra.mxu0 0
    %105 = vmatprep.subr.bf16.mxu0 0
    %106 = vmatpush1.bf16.msra.mxu0 0
    %107 = vmatprep.mubr.bf16.mxu0 0
    %108 = vmatmul.mubr.bf16.gmra.mrb[0].mxu0 %v69
    %v109 = vpop.f32.mrb[0].mxu0
    %v110 = vadd.f32 %v65, %v109
    %v111 = vpop.f32.mrb[0].mxu0
    %v112 = vpop.f32.mrb[0].mxu0
    %v113 = vadd.f32 %v65, %v112
    %v114 = vpop.f32.mrb[0].mxu0
    %115 = vdwg.mxu0
    %v116 = vmax.f32 %v110, 0.0
    %v117 = vmax.f32 %v113, 0.0
    %v118 = vpack.c.bf16 %v117, %v116
    %v119 = vld [vmem:[#allocation2] sm:$0xf]
    %v120 = vld [vmem:[#allocation2 + $0x4] sm:$0xf]
    %v121 = vld [vmem:[#allocation2 + $0x8] sm:$0xf]
    %v122 = vld [vmem:[#allocation2 + $0xc] sm:$0xf]
    %v123 = vld [vmem:[#allocation2 + $0x10] sm:$0xf]
    %v124 = vld [vmem:[#allocation2 + $0x14] sm:$0xf]
    %v125 = vld [vmem:[#allocation2 + $0x18] sm:$0xf]
    %v126 = vld [vmem:[#allocation2 + $0x1c] sm:$0xf]
    %v127 = vld [vmem:[#allocation2 + $0x20] sm:$0xf]
    %v128 = vld [vmem:[#allocation2 + $0x24] sm:$0xf]
    %v129 = vld [vmem:[#allocation2 + $0x28] sm:$0xf]
    %v130 = vld [vmem:[#allocation2 + $0x2c] sm:$0xf]
    %v131 = vld [vmem:[#allocation2 + $0x30] sm:$0xf]
    %v132 = vld [vmem:[#allocation2 + $0x34] sm:$0xf]
    %v133 = vld [vmem:[#allocation2 + $0x38] sm:$0xf]
    %v134 = vld [vmem:[#allocation2 + $0x3c] sm:$0xf]
    %v135 = vld [vmem:[%s4] sm:$0x1]
    %v137 = vlaneseq
    %v138 = vshrl.u32 %v137, 7
    %v139 = vsub.s32 0, %v138
    %v140 = vrot.slane %v135, %v139
    %v158 = vunpack.c.l.b16 %v119
    %v159 = vunpack.c.l.b16 %v120
    %v160 = vunpack.c.l.b16 %v121
    %v161 = vunpack.c.l.b16 %v122
    %v162 = vunpack.c.l.b16 %v123
    %v163 = vunpack.c.l.b16 %v124
    %v164 = vunpack.c.l.b16 %v125
    %v165 = vunpack.c.l.b16 %v126
    %v166 = vunpack.c.l.b16 %v127
    %v167 = vunpack.c.l.b16 %v128
    %v168 = vunpack.c.l.b16 %v129
    %v169 = vunpack.c.l.b16 %v130
    %v170 = vunpack.c.l.b16 %v131
    %v171 = vunpack.c.l.b16 %v132
    %v172 = vunpack.c.l.b16 %v133
    %v173 = vunpack.c.l.b16 %v134
    %v174 = vpack.c.b16 %v159, %v158
    %v175 = vpack.c.b16 %v161, %v160
    %v176 = vpack.c.b16 %v163, %v162
    %v177 = vpack.c.b16 %v165, %v164
    %v178 = vpack.c.b16 %v167, %v166
    %v179 = vpack.c.b16 %v169, %v168
    %v180 = vpack.c.b16 %v171, %v170
    %v181 = vpack.c.b16 %v173, %v172
    %190 = vmatprep.subr.bf16.mxu0 0
    %191 = vmatpush1.bf16.msra.mxu0 %v174
    %192 = vmatprep.subr.bf16.mxu0 0
    %193 = vmatpush1.bf16.msra.mxu0 %v175
    %194 = vmatprep.subr.bf16.mxu0 0
    %195 = vmatpush1.bf16.msra.mxu0 %v176
    %196 = vmatprep.subr.bf16.mxu0 0
    %197 = vmatpush1.bf16.msra.mxu0 %v177
    %198 = vmatprep.subr.bf16.mxu0 0
    %199 = vmatpush1.bf16.msra.mxu0 %v178
    %200 = vmatprep.subr.bf16.mxu0 0
    %201 = vmatpush1.bf16.msra.mxu0 %v179
    %202 = vmatprep.subr.bf16.mxu0 0
    %203 = vmatpush1.bf16.msra.mxu0 %v180
    %204 = vmatprep.subr.bf16.mxu0 0
    %205 = vmatpush1.bf16.msra.mxu0 %v181
    %206 = vmatprep.subr.bf16.mxu0 0
    %207 = vmatpush1.bf16.msra.mxu0 0
    %208 = vmatprep.subr.bf16.mxu0 0
    %209 = vmatpush1.bf16.msra.mxu0 0
    %210 = vmatprep.subr.bf16.mxu0 0
    %211 = vmatpush1.bf16.msra.mxu0 0
    %212 = vmatprep.subr.bf16.mxu0 0
    %213 = vmatpush1.bf16.msra.mxu0 0
    %214 = vmatprep.subr.bf16.mxu0 0
    %215 = vmatpush1.bf16.msra.mxu0 0
    %216 = vmatprep.subr.bf16.mxu0 0
    %217 = vmatpush1.bf16.msra.mxu0 0
    %218 = vmatprep.subr.bf16.mxu0 0
    %219 = vmatpush1.bf16.msra.mxu0 0
    %220 = vmatprep.subr.bf16.mxu0 0
    %221 = vmatpush1.bf16.msra.mxu0 0
    %222 = vmatprep.mubr.bf16.mxu0 0
    %223 = vmatmul.mubr.bf16.gmra.mrb[0].mxu0 %v118
    %v224 = vpop.f32.mrb[0].mxu0
    %v225 = vadd.f32 %v140, %v224
    %v226 = vpop.f32.mrb[0].mxu0
    %v227 = vpop.f32.mrb[0].mxu0
    %v228 = vadd.f32 %v140, %v227
    %v229 = vpop.f32.mrb[0].mxu0
    %230 = vdwg.mxu0
    %v231 = vmax.f32 %v225, 0.0
    %v232 = vmax.f32 %v228, 0.0
    %v233 = vpack.c.bf16 %v232, %v231
    %v234 = vld [vmem:[#allocation5] sm:$0xf]
    %v235 = vld [vmem:[#allocation5 + $0x4] sm:$0xf]
    %v236 = vld [vmem:[#allocation5 + $0x8] sm:$0xf]
    %v237 = vld [vmem:[#allocation5 + $0xc] sm:$0xf]
    %v238 = vld [vmem:[#allocation5 + $0x10] sm:$0xf]
    %v239 = vld [vmem:[#allocation5 + $0x14] sm:$0xf]
    %v240 = vld [vmem:[#allocation5 + $0x18] sm:$0xf]
    %v241 = vld [vmem:[#allocation5 + $0x1c] sm:$0xf]
    %v242 = vld [vmem:[#allocation5 + $0x20] sm:$0xf]
    %v243 = vld [vmem:[#allocation5 + $0x24] sm:$0xf]
    %v244 = vld [vmem:[#allocation5 + $0x28] sm:$0xf]
    %v245 = vld [vmem:[#allocation5 + $0x2c] sm:$0xf]
    %v246 = vld [vmem:[#allocation5 + $0x30] sm:$0xf]
    %v247 = vld [vmem:[#allocation5 + $0x34] sm:$0xf]
    %v248 = vld [vmem:[#allocation5 + $0x38] sm:$0xf]
    %v249 = vld [vmem:[#allocation5 + $0x3c] sm:$0xf]
    %v250 = vld [vmem:[%s6] sm:$0x1]
    %v252 = vlaneseq
    %v253 = vshrl.u32 %v252, 7
    %v254 = vsub.s32 0, %v253
    %v255 = vrot.slane %v250, %v254
    %v273 = vunpack.c.l.b16 %v234
    %v274 = vunpack.c.l.b16 %v235
    %v275 = vunpack.c.l.b16 %v236
    %v276 = vunpack.c.l.b16 %v237
    %v277 = vunpack.c.l.b16 %v238
    %v278 = vunpack.c.l.b16 %v239
    %v279 = vunpack.c.l.b16 %v240
    %v280 = vunpack.c.l.b16 %v241
    %v281 = vunpack.c.l.b16 %v242
    %v282 = vunpack.c.l.b16 %v243
    %v283 = vunpack.c.l.b16 %v244
    %v284 = vunpack.c.l.b16 %v245
    %v285 = vunpack.c.l.b16 %v246
    %v286 = vunpack.c.l.b16 %v247
    %v287 = vunpack.c.l.b16 %v248
    %v288 = vunpack.c.l.b16 %v249
    %v289 = vpack.c.b16 %v274, %v273
    %v290 = vpack.c.b16 %v276, %v275
    %v291 = vpack.c.b16 %v278, %v277
    %v292 = vpack.c.b16 %v280, %v279
    %v293 = vpack.c.b16 %v282, %v281
    %v294 = vpack.c.b16 %v284, %v283
    %v295 = vpack.c.b16 %v286, %v285
    %v296 = vpack.c.b16 %v288, %v287
    %305 = vmatprep.subr.bf16.mxu0 0
    %306 = vmatpush1.bf16.msra.mxu0 %v289
    %307 = vmatprep.subr.bf16.mxu0 0
    %308 = vmatpush1.bf16.msra.mxu0 %v290
    %309 = vmatprep.subr.bf16.mxu0 0
    %310 = vmatpush1.bf16.msra.mxu0 %v291
    %311 = vmatprep.subr.bf16.mxu0 0
    %312 = vmatpush1.bf16.msra.mxu0 %v292
    %313 = vmatprep.subr.bf16.mxu0 0
    %314 = vmatpush1.bf16.msra.mxu0 %v293
    %315 = vmatprep.subr.bf16.mxu0 0
    %316 = vmatpush1.bf16.msra.mxu0 %v294
    %317 = vmatprep.subr.bf16.mxu0 0
    %318 = vmatpush1.bf16.msra.mxu0 %v295
    %319 = vmatprep.subr.bf16.mxu0 0
    %320 = vmatpush1.bf16.msra.mxu0 %v296
    %321 = vmatprep.subr.bf16.mxu0 0
    %322 = vmatpush1.bf16.msra.mxu0 0
    %323 = vmatprep.subr.bf16.mxu0 0
    %324 = vmatpush1.bf16.msra.mxu0 0
    %325 = vmatprep.subr.bf16.mxu0 0
    %326 = vmatpush1.bf16.msra.mxu0 0
    %327 = vmatprep.subr.bf16.mxu0 0
    %328 = vmatpush1.bf16.msra.mxu0 0
    %329 = vmatprep.subr.bf16.mxu0 0
    %330 = vmatpush1.bf16.msra.mxu0 0
    %331 = vmatprep.subr.bf16.mxu0 0
    %332 = vmatpush1.bf16.msra.mxu0 0
    %333 = vmatprep.subr.bf16.mxu0 0
    %334 = vmatpush1.bf16.msra.mxu0 0
    %335 = vmatprep.subr.bf16.mxu0 0
    %336 = vmatpush1.bf16.msra.mxu0 0
    %337 = vmatprep.mubr.bf16.mxu0 0
    %338 = vmatmul.mubr.bf16.gmra.mrb[0].mxu0 %v233
    %v339 = vpop.f32.mrb[0].mxu0
    %v340 = vadd.f32 %v255, %v339
    %v341 = vpop.f32.mrb[0].mxu0
    %v342 = vpop.f32.mrb[0].mxu0
    %v343 = vadd.f32 %v255, %v342
    %v344 = vpop.f32.mrb[0].mxu0
    %345 = vdwg.mxu0
    %346 = vst [vmem:[#allocation7] sm:$0xff] %v340
    %347 = vst [vmem:[#allocation7 + $0x8] sm:$0xff] %v343
    // Predicated region
    $region38: #{_impl.1} parent=1 // pred_check
      _
    $region39: #{_impl.1} parent=1 // pred_check_branch
      %349 = sbr.rel (0) target = $region41
    $region40: #{_impl.1} parent=1 // pred_region
      %s351 = ssub.s32 256, 256
      %352 = vsyncadd [#allocation4], %s351
      %s353 = sshll.u32 [#allocation7], 4
      %s354 = int_to_ptr.vmem [resolvable:$true] %s353
      %359 = dma.vmem_to_hbm [thread:$0]  %s354, 256, %s7, [#allocation4], 128, 128, 8
    $region41: #{_impl.1} parent=1 // pred_fallthru
      _
    // Predicated region
    $region42: #{_impl.1} parent=1 // pred_check
      _
    $region43: #{_impl.1} parent=1 // pred_check_branch
      %361 = sbr.rel (0) target = $region45
    $region44: #{_impl.1} parent=1 // pred_region
      %362 = dma.done [#allocation4], 256
    $region45: #{_impl.1} parent=1 // pred_fallthru
      _
    %363 = vsyncpa [#allocation3], 1
    %364 = vsyncpa [#allocation6], 1
    %365 = vsyncpa [#allocation4], 1

</llo_original>
